<compile_context>
chip_gen: v7x
topology: tpu7x:2x2x1
jax: 0.10.0
libtpu: 0.0.40
codegen_flags: <defaults>
</compile_context>

<pallas_src>
import jax
import jax.numpy as jnp
from jax.experimental import pallas as pl
from jax.experimental.pallas import tpu as pltpu

LANE = 128
PAIRS_PER_ROW = LANE // 2          # 64 batch elements per 128-lane row
DEFAULT_TILE_ROWS = 8192           # 512K batch elems / tile (4 MiB in + 2 MiB out)
MIN_KERNEL_BATCH = 1024            # below this, plain jnp beats a pallas_call


def _round_up(n, m):
    return ((n + m - 1) // m) * m


def linear_kernel(params_ref, x_ref, o_ref):
    """o[r, j] = x[r, 2j]*w0 + x[r, 2j+1]*w1 + b   (j in [0, 64))."""
    # params_ref: SMEM (3,) = [w0, w1, b]
    # x_ref:      VMEM (tile_rows, 128) -- row-major (B, 2) data, features
    #                                      interleaved on even/odd lanes
    # o_ref:      VMEM (tile_rows, 64)  -- one logit per batch element, compact
    w0 = params_ref[0]
    w1 = params_ref[1]
    b = params_ref[2]

    # Selection matrix: de-interleave + weighting + pair-sum + lane compaction
    # fused into one MXU matmul.  W_sel[2j, j] = w0, W_sel[2j+1, j] = w1.
    r = jax.lax.broadcasted_iota(jnp.int32, (LANE, PAIRS_PER_ROW), 0)
    c = jax.lax.broadcasted_iota(jnp.int32, (LANE, PAIRS_PER_ROW), 1)
    w_sel = jnp.where(r == 2 * c, w0, jnp.where(r == 2 * c + 1, w1, 0.0))

    y = jnp.dot(
        x_ref[...],
        w_sel,
        precision=jax.lax.Precision.HIGHEST,
        preferred_element_type=jnp.float32,
    )
    o_ref[...] = (y + b).astype(o_ref.dtype)


def gender_height_weight_forward(
    x, weight, bias, *, tile_rows=DEFAULT_TILE_ROWS, min_kernel_batch=MIN_KERNEL_BATCH
):
    """Forward pass of nn.Linear(2, 1): logits = x @ weight.T + bias.

    x: (B, 2); weight: (1, 2) (PyTorch (out, in) layout); bias: (1,).
    Computes in float32 and returns (B, 1) float32.
    """
    B, F = x.shape
    assert F == 2
    xf = x.astype(jnp.float32)
    w = weight.reshape(-1).astype(jnp.float32)   # [w0, w1]
    b = bias.reshape(-1).astype(jnp.float32)     # [b]

    if B < max(min_kernel_batch, 8 * PAIRS_PER_ROW):
        # Tiny batch: pallas_call launch overhead + padding would dominate.
        return xf[:, 0:1] * w[0] + xf[:, 1:2] * w[1] + b[0]

    # Natural row-major consumption: (B, 2) -> (2B,) -> (B/64, 128) is free.
    b_pad = _round_up(B, PAIRS_PER_ROW)
    flat = xf.reshape(-1)
    if b_pad != B:
        # Only the ragged tail needs padding (one contiguous copy).
        flat = jnp.pad(flat, (0, 2 * (b_pad - B)))
    rows = b_pad // PAIRS_PER_ROW
    x2d = flat.reshape(rows, LANE)

    # Big tiles to amortize per-grid-step overhead, but always >= 2 tiles so
    # the "parallel" grid axis can be split across v7x's two TensorCores.
    tr = min(tile_rows, _round_up(rows, 8))
    if rows > 8 and tr >= rows:
        tr = _round_up(pl.cdiv(rows, 2), 8)
    tr = max(8, (tr // 8) * 8)
    n_tiles = pl.cdiv(rows, tr)

    params = jnp.concatenate([w, b])  # SMEM scalars [w0, w1, b]

    out = pl.pallas_call(
        linear_kernel,
        out_shape=jax.ShapeDtypeStruct((rows, PAIRS_PER_ROW), jnp.float32),
        grid_spec=pltpu.PrefetchScalarGridSpec(
            num_scalar_prefetch=0,
            grid=(n_tiles,),
            in_specs=[
                pl.BlockSpec(memory_space=pltpu.MemorySpace.SMEM),   # params
                pl.BlockSpec((tr, LANE), lambda i: (i, 0)),          # x tile
            ],
            out_specs=pl.BlockSpec((tr, PAIRS_PER_ROW), lambda i: (i, 0)),
        ),
        compiler_params=pltpu.CompilerParams(
            dimension_semantics=("parallel",),      # both TCs on v7x
            vmem_limit_bytes=32 * 1024 * 1024,      # lifts v5e's 16 MiB default
        ),
        cost_estimate=pl.CostEstimate(
            flops=2 * rows * LANE * PAIRS_PER_ROW,
            transcendentals=0,
            bytes_accessed=rows * LANE * 4 + rows * PAIRS_PER_ROW * 4,
        ),
    )(params, x2d)

    out_flat = out.reshape(-1)        # (b_pad,), free row-major reshape
    if b_pad != B:
        out_flat = out_flat[:B]
    return out_flat.reshape(B, 1)


if __name__ == "__main__":
    key = jax.random.PRNGKey(0)
    k_w, k_b, k_x1, k_x2, k_x3 = jax.random.split(key, 5)

    # Deterministic params mimicking nn.Linear(2, 1) init: U(-1/sqrt(2), 1/sqrt(2))
    bound = 1.0 / jnp.sqrt(2.0)
    weight = jax.random.uniform(k_w, (1, 2), jnp.float32, -bound, bound)  # (out, in)
    bias = jax.random.uniform(k_b, (1,), jnp.float32, -bound, bound)

    def ref_fwd(x):
        # Exact f32 elementwise reference: x @ W.T + b
        return x[:, 0:1] * weight[0, 0] + x[:, 1:2] * weight[0, 1] + bias[0]

    # 1) Kernel path: lane-aligned batch (B % 64 == 0), 2 grid tiles.
    B1 = 2048
    x1 = jax.random.normal(k_x1, (B1, 2), jnp.float32)
    y1 = gender_height_weight_forward(x1, weight, bias)
    jax.block_until_ready(y1)
    assert y1.shape == (B1, 1)
    assert jnp.allclose(y1, ref_fwd(x1), atol=1e-5, rtol=1e-5)

    # 2) Kernel path: ragged batch (B % 64 != 0) -> pad + partial last block.
    B2 = 1100
    x2 = jax.random.normal(k_x2, (B2, 2), jnp.float32)
    y2 = gender_height_weight_forward(x2, weight, bias)
    jax.block_until_ready(y2)
    assert y2.shape == (B2, 1)
    assert jnp.allclose(y2, ref_fwd(x2), atol=1e-5, rtol=1e-5)

    # 3) Tiny-batch jnp fallback path.
    B3 = 8
    x3 = jax.random.normal(k_x3, (B3, 2), jnp.float32)
    y3 = gender_height_weight_forward(x3, weight, bias)
    jax.block_until_ready(y3)
    assert y3.shape == (B3, 1)
    assert jnp.allclose(y3, ref_fwd(x3), atol=1e-5, rtol=1e-5)

    print("KERNEL_OK")
</pallas_src>

<mosaic_0001>
module attributes {stable_mosaic.version = 11 : i64} {
  func.func @linear_kernel(%arg0: i32, %arg1: memref<3xf32, #tpu.memory_space<smem>>, %arg2: memref<16x128xf32, #tpu.memory_space<vmem>>, %arg3: memref<16x64xf32, #tpu.memory_space<vmem>>) attributes {dimension_semantics = [#tpu.dimension_semantics<parallel>], iteration_bounds = array<i64: 2>, scalar_prefetch = 0 : i64, scratch_operands = 0 : i64, tpu.core_type = #tpu.core_type<tc>, window_params = [{transform_indices = @transform_0, window_bounds = array<i64: 3>}, {transform_indices = @transform_1, window_bounds = array<i64: 16, 128>}, {transform_indices = @transform_2, window_bounds = array<i64: 16, 64>}]} {
    %c0 = arith.constant 0 : index
    %0 = memref.load %arg1[%c0] : memref<3xf32, #tpu.memory_space<smem>>
    %c1 = arith.constant 1 : index
    %1 = memref.load %arg1[%c1] : memref<3xf32, #tpu.memory_space<smem>>
    %c2 = arith.constant 2 : index
    %2 = memref.load %arg1[%c2] : memref<3xf32, #tpu.memory_space<smem>>
    %3 = tpu.iota {dimensions = array<i32: 0>} : vector<128x64xi32>
    %4 = tpu.iota {dimensions = array<i32: 1>} : vector<128x64xi32>
    %c2_i32 = arith.constant 2 : i32
    %5 = vector.broadcast %c2_i32 : i32 to vector<128x64xi32>
    %6 = arith.muli %5, %4 : vector<128x64xi32>
    %7 = arith.cmpi eq, %3, %6 : vector<128x64xi32>
    %c2_i32_0 = arith.constant 2 : i32
    %8 = vector.broadcast %c2_i32_0 : i32 to vector<128x64xi32>
    %9 = arith.muli %8, %4 : vector<128x64xi32>
    %c1_i32 = arith.constant 1 : i32
    %10 = vector.broadcast %c1_i32 : i32 to vector<128x64xi32>
    %11 = arith.addi %9, %10 : vector<128x64xi32>
    %12 = arith.cmpi eq, %3, %11 : vector<128x64xi32>
    %cst = arith.constant 0.000000e+00 : f32
    %13 = vector.broadcast %1 : f32 to vector<128x64xf32>
    %14 = vector.broadcast %cst : f32 to vector<128x64xf32>
    %15 = arith.select %12, %13, %14 : vector<128x64xi1>, vector<128x64xf32>
    %16 = vector.broadcast %0 : f32 to vector<128x64xf32>
    %17 = arith.select %7, %16, %15 : vector<128x64xi1>, vector<128x64xf32>
    %c0_1 = arith.constant 0 : index
    %c0_2 = arith.constant 0 : index
    %18 = vector.load %arg2[%c0_1, %c0_2] : memref<16x128xf32, #tpu.memory_space<vmem>>, vector<16x128xf32>
    %cst_3 = arith.constant dense<0.000000e+00> : vector<16x64xf32>
    %19 = tpu.matmul %18, %17, %cst_3 {dimension_numbers = #tpu.dot_dimension_numbers<[1], [0], [0], [1], [0, 0, 1, 1], [], []>, precision = #tpu.contract_precision<fp32>} : vector<16x128xf32>, vector<128x64xf32>, vector<16x64xf32> -> vector<16x64xf32>
    %20 = vector.broadcast %2 : f32 to vector<16x64xf32>
    %21 = arith.addf %19, %20 : vector<16x64xf32>
    %c0_4 = arith.constant 0 : index
    %c0_5 = arith.constant 0 : index
    %22 = vector.load %arg3[%c0_4, %c0_5] : memref<16x64xf32, #tpu.memory_space<vmem>>, vector<16x64xf32>
    tpu.vector_store %arg3[%c0_4, %c0_5], %21 {strides = array<i32>} : memref<16x64xf32, #tpu.memory_space<vmem>>, vector<16x64xf32>,
    return
  }
  func.func @transform_0(%arg0: i32) -> i32 {
    %c0_i32 = arith.constant 0 : i32
    %c0_i32_0 = arith.constant 0 : i32
    return %c0_i32 : i32
  }
  func.func @transform_1(%arg0: i32) -> (i32, i32) {
    %c0_i32 = arith.constant 0 : i32
    %c0_i32_0 = arith.constant 0 : i32
    return %arg0, %c0_i32 : i32, i32
  }
  func.func @transform_2(%arg0: i32) -> (i32, i32) {
    %c0_i32 = arith.constant 0 : i32
    %c0_i32_0 = arith.constant 0 : i32
    return %arg0, %c0_i32 : i32, i32
  }
}

</mosaic_0001>

<llo_original>
// kernel: tpu_custom_call.1
$region0: #{tpu_custom_call.1}
  #allocation0 [shape = 'u32[]', space=smem, size = 0x4, offset = 0x4, fixed_abs, tag = 'smem constant byte address 0x4 - core index']
  #allocation1 [shape = 'u32[144,128]{1,0:T(1,128)}', space=vmem, size = 0x12000, scoped, tag = 'internal scratch']
  %s0 = inlined_call_operand.hbm [shape: f32[3], index: 0, kind: input, shape index: {}]
  %s1 = inlined_call_operand.hbm [shape: f32[32,128], index: 1, kind: input, shape index: {}]
  %s2 = inlined_call_operand.hbm [shape: f32[32,64], index: 2, kind: output, shape index: {}]
  %s3 = sld [smem:[#allocation0]]
  $region49: #{tpu_custom_call.1} parent=0
    _
  %s5 = ssub.s32 1, %s3
  %s6 = scalar_select 0, %s5, %s3
  $region1: #{tpu_custom_call.1} parent=0
    #allocation2 [shape = 'u8[512]{0}', space=smem, size = 0x200, scoped, tag = 'input window, operand 0, single buffered']
    #allocation3 [shape = 's32[2]{0}', space=sflag, size = 0x8, scoped, tag = 'scoped memory for tpu_custom_call.1']
    #allocation4 [shape = 's32[2]{0}', space=sflag, size = 0x8, scoped, tag = 'scoped memory for tpu_custom_call.1']
    #allocation5 [shape = 's32[2]{0}', space=sflag, size = 0x8, scoped, tag = 'scoped memory for tpu_custom_call.1']
    #allocation6 [shape = 'u8[16384]{0}', space=vmem, size = 0x4000, scoped, tag = 'input window, operand 1']
    #allocation7 [shape = 'u8[16384]{0}', space=vmem, size = 0x4000, scoped, tag = 'output window, operand 0']
    %7 = vsyncpa [#allocation5], 0
    %8 = vsyncpa [#allocation3], 0
    %s9 = scalar_lea.sflag [#allocation3], 1
    %10 = vsyncpa %s9, 0
    %11 = vsyncpa [#allocation4], 0
    %s12 = scalar_lea.sflag [#allocation4], 1
    %13 = vsyncpa %s12, 0
    loop: start=0, step=1, limit=4
    $region2: #{tpu_custom_call.1} parent=1 // loop_pre_header
      _
    $region3: #{tpu_custom_call.1} parent=1 // loop_header
      %s15 = sphi 0, %s19
      %p16 = scmp.ge.s32.totalorder %s15, 4
      %s23 = sphi 0, %s23
      %s25 = sphi 0, %s23
      %s26 = sphi 0, %s25
      %s40 = sphi 0, %s26
      %s46 = sphi 0, %s48
      %s49 = sphi 0, %s46
      %s50 = sphi 0, %s49
      %s66 = sphi 0, %s50
      %s72 = sphi 0, %s74
      %s75 = sphi 0, %s72
      %s76 = sphi 0, %s75
      %s92 = sphi 0, %s76
    $region4: #{tpu_custom_call.1} parent=1 // loop_header_branch
      %18 = sbr.rel (%p16) target = $region8
    $region5: #{tpu_custom_call.1} parent=1 // loop_body
      %s20 = ssub.s32 %s15, 1
      %s21 = ssub.s32 %s15, 2
      %s22 = sadd.s32 %s15, 1
      %s24 = sadd.s32 %s23, 1
      %p27 = scmp.eq.s32.totalorder %s15, 1
      %p28 = scmp.ne.s32.totalorder %s23, %s25
      %p29 = scmp.eq.s32.totalorder %s15, 0
      %p30 = por %p28, %p29
      %p31 = scmp.ne.s32.totalorder %s23, %s25
      %p32 = scmp.eq.s32.totalorder %s20, 1
      %p33 = por %p31, %p32
      %p34 = scmp.ne.s32.totalorder %s25, %s26
      %p35 = scmp.eq.s32.totalorder %s20, 0
      %p36 = por %p34, %p35
      %p37 = scmp.ne.s32.totalorder %s25, %s26
      %p38 = scmp.eq.s32.totalorder %s21, 1
      %p39 = por %p37, %p38
      %p41 = scmp.ne.s32.totalorder %s26, %s40
      %p42 = scmp.eq.s32.totalorder %s21, 0
      %p43 = por %p41, %p42
      %s44 = ssub.s32 %s15, %s22
      %p45 = scmp.eq.s32.totalorder %s44, 0
      %s47 = sadd.s32 %s46, 1
      %s48 = scalar_select %p45, %s46, %s47
      %p51 = pneg %p45
      %p52 = scmp.eq.s32.totalorder %s15, 1
      %p53 = por %p51, %p52
      %p54 = scmp.ne.s32.totalorder %s46, %s49
      %p55 = scmp.eq.s32.totalorder %s15, 0
      %p56 = por %p54, %p55
      %p57 = scmp.ne.s32.totalorder %s46, %s49
      %p58 = scmp.eq.s32.totalorder %s20, 1
      %p59 = por %p57, %p58
      %p60 = scmp.ne.s32.totalorder %s49, %s50
      %p61 = scmp.eq.s32.totalorder %s20, 0
      %p62 = por %p60, %p61
      %p63 = scmp.ne.s32.totalorder %s49, %s50
      %p64 = scmp.eq.s32.totalorder %s21, 1
      %p65 = por %p63, %p64
      %p67 = scmp.ne.s32.totalorder %s50, %s66
      %p68 = scmp.eq.s32.totalorder %s21, 0
      %p69 = por %p67, %p68
      %s70 = ssub.s32 %s15, %s22
      %p71 = scmp.eq.s32.totalorder %s70, 0
      %s73 = sadd.s32 %s72, 1
      %s74 = scalar_select %p71, %s72, %s73
      %p77 = pneg %p71
      %p78 = scmp.eq.s32.totalorder %s15, 1
      %p79 = por %p77, %p78
      %p80 = scmp.ne.s32.totalorder %s72, %s75
      %p81 = scmp.eq.s32.totalorder %s15, 0
      %p82 = por %p80, %p81
      %p83 = scmp.ne.s32.totalorder %s72, %s75
      %p84 = scmp.eq.s32.totalorder %s20, 1
      %p85 = por %p83, %p84
      %p86 = scmp.ne.s32.totalorder %s75, %s76
      %p87 = scmp.eq.s32.totalorder %s20, 0
      %p88 = por %p86, %p87
      %p89 = scmp.ne.s32.totalorder %s75, %s76
      %p90 = scmp.eq.s32.totalorder %s21, 1
      %p91 = por %p89, %p90
      %p93 = scmp.ne.s32.totalorder %s76, %s92
      %p94 = scmp.eq.s32.totalorder %s21, 0
      %p95 = por %p93, %p94
      %p96 = scmp.le.s32.totalorder 1, %s15
      %p97 = scmp.lt.s32.totalorder %s15, 3
      %p98 = pnand %p96, %p97
      %p99 = pneg %p98
      // Predicated region
      $region9: #{tpu_custom_call.1} parent=5 // pred_check
        _
      $region10: #{tpu_custom_call.1} parent=5 // pred_check_branch
        %101 = sbr.rel (%p98) target = $region12
      $region11: #{tpu_custom_call.1} parent=5 // pred_region
        %s102 = ssub.s32 %s15, 1
        // Predicated region
        $region13: #{tpu_custom_call.1} parent=11 // pred_check
          %p103 = pneg %p36
        $region14: #{tpu_custom_call.1} parent=11 // pred_check_branch
          %105 = sbr.rel (%p103) target = $region16
        $region15: #{tpu_custom_call.1} parent=11 // pred_region
          %s107 = ssub.s32 16, 16
          %108 = vsyncadd [#allocation5], %s107
          %111 = dma.hbm_to_smem %s0, 16, [#allocation2], [#allocation5]
        $region16: #{tpu_custom_call.1} parent=11 // pred_fallthru
          _
      $region12: #{tpu_custom_call.1} parent=5 // pred_fallthru
        _
      %p112 = scmp.lt.s32.totalorder %s15, 2
      // Predicated region
      $region17: #{tpu_custom_call.1} parent=5 // pred_check
        %p113 = pneg %p112
      $region18: #{tpu_custom_call.1} parent=5 // pred_check_branch
        %115 = sbr.rel (%p113) target = $region20
      $region19: #{tpu_custom_call.1} parent=5 // pred_region
        // Predicated region
        $region21: #{tpu_custom_call.1} parent=19 // pred_check
          %p116 = pneg %p56
        $region22: #{tpu_custom_call.1} parent=19 // pred_check_branch
          %118 = sbr.rel (%p116) target = $region24
        $region23: #{tpu_custom_call.1} parent=19 // pred_region
          %s119 = sand.u32 %s46, 1
          %s120 = scalar_lea.sflag [#allocation3], %s119
          %s121 = sand.u32 %s46, 1
          %s122 = smul.addr %s121, 16
          %s123 = scalar_lea.vmem [#allocation6], %s122
          %s124 = smul.u32 2, %s15
          %s126 = ssub.s32 256, 256
          %127 = vsyncadd %s120, %s126
          %s128 = smul.addr %s124, 128
          %s129 = scalar_lea.hbm %s1, %s128
          %s130 = sshll.u32 %s123, 4
          %s131 = int_to_ptr.vmem [resolvable:$true] %s130
          %136 = dma.hbm_to_vmem [thread:$0]  %s129, 256, %s131, %s120, 128, 128, 8
        $region24: #{tpu_custom_call.1} parent=19 // pred_fallthru
          _
      $region20: #{tpu_custom_call.1} parent=5 // pred_fallthru
        _
      %p137 = scmp.le.s32.totalorder 1, %s15
      %p138 = scmp.lt.s32.totalorder %s15, 3
      %p139 = pnand %p137, %p138
      %p140 = pneg %p139
      // Predicated region
      $region25: #{tpu_custom_call.1} parent=5 // pred_check
        _
      $region26: #{tpu_custom_call.1} parent=5 // pred_check_branch
        %142 = sbr.rel (%p139) target = $region28
      $region27: #{tpu_custom_call.1} parent=5 // pred_region
        %s143 = ssub.s32 %s15, 1
        // Predicated region
        $region29: #{tpu_custom_call.1} parent=27 // pred_check
          %p144 = pneg %p36
        $region30: #{tpu_custom_call.1} parent=27 // pred_check_branch
          %146 = sbr.rel (%p144) target = $region32
        $region31: #{tpu_custom_call.1} parent=27 // pred_region
          %147 = dma.done [#allocation5], 16
        $region32: #{tpu_custom_call.1} parent=27 // pred_fallthru
          _
        %s148 = sand.u32 %s49, 1
        %s149 = scalar_lea.sflag [#allocation3], %s148
        %s150 = sand.u32 %s49, 1
        %s151 = smul.addr %s150, 16
        %s152 = scalar_lea.vmem [#allocation6], %s151
        // Predicated region
        $region33: #{tpu_custom_call.1} parent=27 // pred_check
          %p153 = pneg %p62
        $region34: #{tpu_custom_call.1} parent=27 // pred_check_branch
          %155 = sbr.rel (%p153) target = $region36
        $region35: #{tpu_custom_call.1} parent=27 // pred_region
          %156 = dma.done %s149, 256
        $region36: #{tpu_custom_call.1} parent=27 // pred_fallthru
          _
        %157 = sfence
        %p158 = pneg %p36
        %p159 = pneg %p33
        %s160 = sand.u32 %s49, 1
        %s161 = scalar_lea.sflag [#allocation3], %s160
        %s162 = sand.u32 %s49, 1
        %s163 = smul.addr %s162, 16
        %s164 = scalar_lea.vmem [#allocation6], %s163
        %p165 = pneg %p62
        %p166 = pneg %p59
        %p167 = pneg %p88
        %p168 = pneg %p85
        %s169 = sand.u32 %s75, 1
        %s170 = scalar_lea.sflag [#allocation4], %s169
        %s171 = sand.u32 %s75, 1
        %s172 = smul.addr %s171, 16
        %s173 = scalar_lea.vmem [#allocation7], %s172
        %s174 = smul.u32 2, %s20
        %s175 = smul.u32 2, %s20
        %s176 = sld [smem:[#allocation2]]
        %s177 = sld [smem:[#allocation2 + $0x1]]
        %s178 = sld [smem:[#allocation2 + $0x2]]
        %v179 = vlaneseq
        %v180 = vshrl.u32 %v179, 7
        %v181 = vadd.s32 %v180, 8
        %v182 = vadd.s32 %v180, 16
        %v183 = vadd.s32 %v180, 24
        %v184 = vadd.s32 %v180, 32
        %v185 = vadd.s32 %v180, 40
        %v186 = vadd.s32 %v180, 48
        %v187 = vadd.s32 %v180, 56
        %v188 = vadd.s32 %v180, 64
        %v189 = vadd.s32 %v180, 72
        %v190 = vadd.s32 %v180, 80
        %v191 = vadd.s32 %v180, 88
        %v192 = vadd.s32 %v180, 96
        %v193 = vadd.s32 %v180, 104
        %v194 = vadd.s32 %v180, 112
        %v195 = vadd.s32 %v180, 120
        %v196 = vlaneseq
        %v197 = vand.u32 %v196, 127
        %v198 = vmul.u32 %v197, 2
        %vm199 = vcmp.eq.s32.totalorder %v180, %v198
        %vm200 = vcmp.eq.s32.totalorder %v181, %v198
        %vm201 = vcmp.eq.s32.totalorder %v182, %v198
        %vm202 = vcmp.eq.s32.totalorder %v183, %v198
        %vm203 = vcmp.eq.s32.totalorder %v184, %v198
        %vm204 = vcmp.eq.s32.totalorder %v185, %v198
        %vm205 = vcmp.eq.s32.totalorder %v186, %v198
        %vm206 = vcmp.eq.s32.totalorder %v187, %v198
        %vm207 = vcmp.eq.s32.totalorder %v188, %v198
        %vm208 = vcmp.eq.s32.totalorder %v189, %v198
        %vm209 = vcmp.eq.s32.totalorder %v190, %v198
        %vm210 = vcmp.eq.s32.totalorder %v191, %v198
        %vm211 = vcmp.eq.s32.totalorder %v192, %v198
        %vm212 = vcmp.eq.s32.totalorder %v193, %v198
        %vm213 = vcmp.eq.s32.totalorder %v194, %v198
        %vm214 = vcmp.eq.s32.totalorder %v195, %v198
        %v215 = vadd.s32 %v198, 1
        %vm216 = vcmp.eq.s32.totalorder %v180, %v215
        %vm217 = vcmp.eq.s32.totalorder %v181, %v215
        %vm218 = vcmp.eq.s32.totalorder %v182, %v215
        %vm219 = vcmp.eq.s32.totalorder %v183, %v215
        %vm220 = vcmp.eq.s32.totalorder %v184, %v215
        %vm221 = vcmp.eq.s32.totalorder %v185, %v215
        %vm222 = vcmp.eq.s32.totalorder %v186, %v215
        %vm223 = vcmp.eq.s32.totalorder %v187, %v215
        %vm224 = vcmp.eq.s32.totalorder %v188, %v215
        %vm225 = vcmp.eq.s32.totalorder %v189, %v215
        %vm226 = vcmp.eq.s32.totalorder %v190, %v215
        %vm227 = vcmp.eq.s32.totalorder %v191, %v215
        %vm228 = vcmp.eq.s32.totalorder %v192, %v215
        %vm229 = vcmp.eq.s32.totalorder %v193, %v215
        %vm230 = vcmp.eq.s32.totalorder %v194, %v215
        %vm231 = vcmp.eq.s32.totalorder %v195, %v215
        %v232 = vstv %s177
        %v233 = vsel %vm216, %v232, 0.0
        %v234 = vsel %vm217, %v232, 0.0
        %v235 = vsel %vm218, %v232, 0.0
        %v236 = vsel %vm219, %v232, 0.0
        %v237 = vsel %vm220, %v232, 0.0
        %v238 = vsel %vm221, %v232, 0.0
        %v239 = vsel %vm222, %v232, 0.0
        %v240 = vsel %vm223, %v232, 0.0
        %v241 = vsel %vm224, %v232, 0.0
        %v242 = vsel %vm225, %v232, 0.0
        %v243 = vsel %vm226, %v232, 0.0
        %v244 = vsel %vm227, %v232, 0.0
        %v245 = vsel %vm228, %v232, 0.0
        %v246 = vsel %vm229, %v232, 0.0
        %v247 = vsel %vm230, %v232, 0.0
        %v248 = vsel %vm231, %v232, 0.0
        %v249 = vstv %s176
        %v250 = vsel %vm199, %v249, %v233
        %v251 = vsel %vm200, %v249, %v234
        %v252 = vsel %vm201, %v249, %v235
        %v253 = vsel %vm202, %v249, %v236
        %v254 = vsel %vm203, %v249, %v237
        %v255 = vsel %vm204, %v249, %v238
        %v256 = vsel %vm205, %v249, %v239
        %v257 = vsel %vm206, %v249, %v240
        %v258 = vsel %vm207, %v249, %v241
        %v259 = vsel %vm208, %v249, %v242
        %v260 = vsel %vm209, %v249, %v243
        %v261 = vsel %vm210, %v249, %v244
        %v262 = vsel %vm211, %v249, %v245
        %v263 = vsel %vm212, %v249, %v246
        %v264 = vsel %vm213, %v249, %v247
        %v265 = vsel %vm214, %v249, %v248
        %v266 = vld [vmem:[%s152] sm:$0xff]
        %v267 = vld [vmem:[%s152 + $0x8] sm:$0xff]
        %v268 = vstv %s178
        %269 = vmatprep.subr.mxu0 0.0
        %v270 = vand.u32 %v250, 4294901760
        %271 = vmatpush1.msra.mxu0 %v270
        %272 = vmatprep.subr.mxu0 0.0
        %v273 = vand.u32 %v251, 4294901760
        %274 = vmatpush1.msra.mxu0 %v273
        %275 = vmatprep.subr.mxu0 0.0
        %v276 = vand.u32 %v252, 4294901760
        %277 = vmatpush1.msra.mxu0 %v276
        %278 = vmatprep.subr.mxu0 0.0
        %v279 = vand.u32 %v253, 4294901760
        %280 = vmatpush1.msra.mxu0 %v279
        %281 = vmatprep.subr.mxu0 0.0
        %v282 = vand.u32 %v254, 4294901760
        %283 = vmatpush1.msra.mxu0 %v282
        %284 = vmatprep.subr.mxu0 0.0
        %v285 = vand.u32 %v255, 4294901760
        %286 = vmatpush1.msra.mxu0 %v285
        %287 = vmatprep.subr.mxu0 0.0
        %v288 = vand.u32 %v256, 4294901760
        %289 = vmatpush1.msra.mxu0 %v288
        %290 = vmatprep.subr.mxu0 0.0
        %v291 = vand.u32 %v257, 4294901760
        %292 = vmatpush1.msra.mxu0 %v291
        %293 = vmatprep.subr.mxu0 0.0
        %v294 = vand.u32 %v258, 4294901760
        %295 = vmatpush1.msra.mxu0 %v294
        %296 = vmatprep.subr.mxu0 0.0
        %v297 = vand.u32 %v259, 4294901760
        %298 = vmatpush1.msra.mxu0 %v297
        %299 = vmatprep.subr.mxu0 0.0
        %v300 = vand.u32 %v260, 4294901760
        %301 = vmatpush1.msra.mxu0 %v300
        %302 = vmatprep.subr.mxu0 0.0
        %v303 = vand.u32 %v261, 4294901760
        %304 = vmatpush1.msra.mxu0 %v303
        %305 = vmatprep.subr.mxu0 0.0
        %v306 = vand.u32 %v262, 4294901760
        %307 = vmatpush1.msra.mxu0 %v306
        %308 = vmatprep.subr.mxu0 0.0
        %v309 = vand.u32 %v263, 4294901760
        %310 = vmatpush1.msra.mxu0 %v309
        %311 = vmatprep.subr.mxu0 0.0
        %v312 = vand.u32 %v264, 4294901760
        %313 = vmatpush1.msra.mxu0 %v312
        %314 = vmatprep.subr.mxu0 0.0
        %v315 = vand.u32 %v265, 4294901760
        %316 = vmatpush1.msra.mxu0 %v315
        %317 = vmatprep.subr.mxu0 0.0
        %318 = vmatpush1.msra.mxu0 0.0
        %319 = vmatprep.subr.mxu0 0.0
        %320 = vmatpush1.msra.mxu0 0.0
        %321 = vmatprep.subr.mxu0 0.0
        %322 = vmatpush1.msra.mxu0 0.0
        %323 = vmatprep.subr.mxu0 0.0
        %324 = vmatpush1.msra.mxu0 0.0
        %325 = vmatprep.subr.mxu0 0.0
        %326 = vmatpush1.msra.mxu0 0.0
        %327 = vmatprep.subr.mxu0 0.0
        %328 = vmatpush1.msra.mxu0 0.0
        %329 = vmatprep.subr.mxu0 0.0
        %330 = vmatpush1.msra.mxu0 0.0
        %331 = vmatprep.subr.mxu0 0.0
        %332 = vmatpush1.msra.mxu0 0.0
        %333 = vmatprep.subr.mxu0 0.0
        %334 = vmatpush1.msra.mxu0 0.0
        %335 = vmatprep.subr.mxu0 0.0
        %336 = vmatpush1.msra.mxu0 0.0
        %337 = vmatprep.subr.mxu0 0.0
        %338 = vmatpush1.msra.mxu0 0.0
        %339 = vmatprep.subr.mxu0 0.0
        %340 = vmatpush1.msra.mxu0 0.0
        %341 = vmatprep.subr.mxu0 0.0
        %342 = vmatpush1.msra.mxu0 0.0
        %343 = vmatprep.subr.mxu0 0.0
        %344 = vmatpush1.msra.mxu0 0.0
        %345 = vmatprep.subr.mxu0 0.0
        %346 = vmatpush1.msra.mxu0 0.0
        %347 = vmatprep.subr.mxu0 0.0
        %348 = vmatpush1.msra.mxu0 0.0
        %349 = vmatprep.mubr.f32.mxu0 0.0
        %v350 = vand.u32 %v266, 4294901760
        %v351 = vsub.f32 %v266, %v350
        %v352 = vand.u32 %v351, 4294901760
        %v353 = vsub.f32 %v351, %v352
        %v354 = vand.u32 %v353, 4294901760
        %355 = vmatmul.mubr.f32.gmra.mrb[0].mxu0 %v354
        %v356 = vpop.f32.mrb[0].mxu0
        %v357 = vadd.f32 %v268, %v356
        %v358 = vpop.f32.mrb[0].mxu0
        %359 = vmatprep.mubr.f32.mxu0 0.0
        %v360 = vand.u32 %v267, 4294901760
        %v361 = vsub.f32 %v267, %v360
        %v362 = vand.u32 %v361, 4294901760
        %v363 = vsub.f32 %v361, %v362
        %v364 = vand.u32 %v363, 4294901760
        %365 = vmatmul.mubr.f32.gmra.mrb[0].mxu0 %v364
        %v366 = vpop.f32.mrb[0].mxu0
        %v367 = vadd.f32 %v268, %v366
        %v368 = vpop.f32.mrb[0].mxu0
        %369 = vdwg.mxu0
        %370 = vmatprep.subr.mxu0 0.0
        %v371 = vand.u32 %v250, 4294901760
        %v372 = vsub.f32 %v250, %v371
        %v373 = vand.u32 %v372, 4294901760
        %v374 = vsub.f32 %v372, %v373
        %v375 = vand.u32 %v374, 4294901760
        %376 = vmatpush1.msra.mxu0 %v375
        %377 = vmatprep.subr.mxu0 0.0
        %v378 = vand.u32 %v251, 4294901760
        %v379 = vsub.f32 %v251, %v378
        %v380 = vand.u32 %v379, 4294901760
        %v381 = vsub.f32 %v379, %v380
        %v382 = vand.u32 %v381, 4294901760
        %383 = vmatpush1.msra.mxu0 %v382
        %384 = vmatprep.subr.mxu0 0.0
        %v385 = vand.u32 %v252, 4294901760
        %v386 = vsub.f32 %v252, %v385
        %v387 = vand.u32 %v386, 4294901760
        %v388 = vsub.f32 %v386, %v387
        %v389 = vand.u32 %v388, 4294901760
        %390 = vmatpush1.msra.mxu0 %v389
        %391 = vmatprep.subr.mxu0 0.0
        %v392 = vand.u32 %v253, 4294901760
        %v393 = vsub.f32 %v253, %v392
        %v394 = vand.u32 %v393, 4294901760
        %v395 = vsub.f32 %v393, %v394
        %v396 = vand.u32 %v395, 4294901760
        %397 = vmatpush1.msra.mxu0 %v396
        %398 = vmatprep.subr.mxu0 0.0
        %v399 = vand.u32 %v254, 4294901760
        %v400 = vsub.f32 %v254, %v399
        %v401 = vand.u32 %v400, 4294901760
        %v402 = vsub.f32 %v400, %v401
        %v403 = vand.u32 %v402, 4294901760
        %404 = vmatpush1.msra.mxu0 %v403
        %405 = vmatprep.subr.mxu0 0.0
        %v406 = vand.u32 %v255, 4294901760
        %v407 = vsub.f32 %v255, %v406
        %v408 = vand.u32 %v407, 4294901760
        %v409 = vsub.f32 %v407, %v408
        %v410 = vand.u32 %v409, 4294901760
        %411 = vmatpush1.msra.mxu0 %v410
        %412 = vmatprep.subr.mxu0 0.0
        %v413 = vand.u32 %v256, 4294901760
        %v414 = vsub.f32 %v256, %v413
        %v415 = vand.u32 %v414, 4294901760
        %v416 = vsub.f32 %v414, %v415
        %v417 = vand.u32 %v416, 4294901760
        %418 = vmatpush1.msra.mxu0 %v417
        %419 = vmatprep.subr.mxu0 0.0
        %v420 = vand.u32 %v257, 4294901760
        %v421 = vsub.f32 %v257, %v420
        %v422 = vand.u32 %v421, 4294901760
        %v423 = vsub.f32 %v421, %v422
        %v424 = vand.u32 %v423, 4294901760
        %425 = vmatpush1.msra.mxu0 %v424
        %426 = vmatprep.subr.mxu0 0.0
        %v427 = vand.u32 %v258, 4294901760
        %v428 = vsub.f32 %v258, %v427
        %v429 = vand.u32 %v428, 4294901760
        %v430 = vsub.f32 %v428, %v429
        %v431 = vand.u32 %v430, 4294901760
        %432 = vmatpush1.msra.mxu0 %v431
        %433 = vmatprep.subr.mxu0 0.0
        %v434 = vand.u32 %v259, 4294901760
        %v435 = vsub.f32 %v259, %v434
        %v436 = vand.u32 %v435, 4294901760
        %v437 = vsub.f32 %v435, %v436
        %v438 = vand.u32 %v437, 4294901760
        %439 = vmatpush1.msra.mxu0 %v438
        %440 = vmatprep.subr.mxu0 0.0
        %v441 = vand.u32 %v260, 4294901760
        %v442 = vsub.f32 %v260, %v441
        %v443 = vand.u32 %v442, 4294901760
        %v444 = vsub.f32 %v442, %v443
        %v445 = vand.u32 %v444, 4294901760
        %446 = vmatpush1.msra.mxu0 %v445
        %447 = vmatprep.subr.mxu0 0.0
        %v448 = vand.u32 %v261, 4294901760
        %v449 = vsub.f32 %v261, %v448
        %v450 = vand.u32 %v449, 4294901760
        %v451 = vsub.f32 %v449, %v450
        %v452 = vand.u32 %v451, 4294901760
        %453 = vmatpush1.msra.mxu0 %v452
        %454 = vmatprep.subr.mxu0 0.0
        %v455 = vand.u32 %v262, 4294901760
        %v456 = vsub.f32 %v262, %v455
        %v457 = vand.u32 %v456, 4294901760
        %v458 = vsub.f32 %v456, %v457
        %v459 = vand.u32 %v458, 4294901760
        %460 = vmatpush1.msra.mxu0 %v459
        %461 = vmatprep.subr.mxu0 0.0
        %v462 = vand.u32 %v263, 4294901760
        %v463 = vsub.f32 %v263, %v462
        %v464 = vand.u32 %v463, 4294901760
        %v465 = vsub.f32 %v463, %v464
        %v466 = vand.u32 %v465, 4294901760
        %467 = vmatpush1.msra.mxu0 %v466
        %468 = vmatprep.subr.mxu0 0.0
        %v469 = vand.u32 %v264, 4294901760
        %v470 = vsub.f32 %v264, %v469
        %v471 = vand.u32 %v470, 4294901760
        %v472 = vsub.f32 %v470, %v471
        %v473 = vand.u32 %v472, 4294901760
        %474 = vmatpush1.msra.mxu0 %v473
        %475 = vmatprep.subr.mxu0 0.0
        %v476 = vand.u32 %v265, 4294901760
        %v477 = vsub.f32 %v265, %v476
        %v478 = vand.u32 %v477, 4294901760
        %v479 = vsub.f32 %v477, %v478
        %v480 = vand.u32 %v479, 4294901760
        %481 = vmatpush1.msra.mxu0 %v480
        %482 = vmatprep.subr.mxu0 0.0
        %483 = vmatpush1.msra.mxu0 0.0
        %484 = vmatprep.subr.mxu0 0.0
        %485 = vmatpush1.msra.mxu0 0.0
        %486 = vmatprep.subr.mxu0 0.0
        %487 = vmatpush1.msra.mxu0 0.0
        %488 = vmatprep.subr.mxu0 0.0
        %489 = vmatpush1.msra.mxu0 0.0
        %490 = vmatprep.subr.mxu0 0.0
        %491 = vmatpush1.msra.mxu0 0.0
        %492 = vmatprep.subr.mxu0 0.0
        %493 = vmatpush1.msra.mxu0 0.0
        %494 = vmatprep.subr.mxu0 0.0
        %495 = vmatpush1.msra.mxu0 0.0
        %496 = vmatprep.subr.mxu0 0.0
        %497 = vmatpush1.msra.mxu0 0.0
        %498 = vmatprep.subr.mxu0 0.0
        %499 = vmatpush1.msra.mxu0 0.0
        %500 = vmatprep.subr.mxu0 0.0
        %501 = vmatpush1.msra.mxu0 0.0
        %502 = vmatprep.subr.mxu0 0.0
        %503 = vmatpush1.msra.mxu0 0.0
        %504 = vmatprep.subr.mxu0 0.0
        %505 = vmatpush1.msra.mxu0 0.0
        %506 = vmatprep.subr.mxu0 0.0
        %507 = vmatpush1.msra.mxu0 0.0
        %508 = vmatprep.subr.mxu0 0.0
        %509 = vmatpush1.msra.mxu0 0.0
        %510 = vmatprep.subr.mxu0 0.0
        %511 = vmatpush1.msra.mxu0 0.0
        %512 = vmatprep.subr.mxu0 0.0
        %513 = vmatpush1.msra.mxu0 0.0
        %514 = vmatprep.mubr.f32.mxu0 0.0
        %v515 = vand.u32 %v266, 4294901760
        %516 = vmatmul.mubr.f32.gmra.mrb[0].mxu0 %v515
        %v517 = vpop.f32.mrb[0].mxu0
        %v518 = vadd.f32 %v357, %v517
        %v519 = vpop.f32.mrb[0].mxu0
        %520 = vmatprep.mubr.f32.mxu0 0.0
        %v521 = vand.u32 %v267, 4294901760
        %522 = vmatmul.mubr.f32.gmra.mrb[0].mxu0 %v521
        %v523 = vpop.f32.mrb[0].mxu0
        %v524 = vadd.f32 %v367, %v523
        %v525 = vpop.f32.mrb[0].mxu0
        %526 = vdwg.mxu0
        %527 = vmatprep.subr.mxu0 0.0
        %v528 = vand.u32 %v250, 4294901760
        %v529 = vsub.f32 %v250, %v528
        %530 = vmatpush1.msra.mxu0 %v529
        %531 = vmatprep.subr.mxu0 0.0
        %v532 = vand.u32 %v251, 4294901760
        %v533 = vsub.f32 %v251, %v532
        %534 = vmatpush1.msra.mxu0 %v533
        %535 = vmatprep.subr.mxu0 0.0
        %v536 = vand.u32 %v252, 4294901760
        %v537 = vsub.f32 %v252, %v536
        %538 = vmatpush1.msra.mxu0 %v537
        %539 = vmatprep.subr.mxu0 0.0
        %v540 = vand.u32 %v253, 4294901760
        %v541 = vsub.f32 %v253, %v540
        %542 = vmatpush1.msra.mxu0 %v541
        %543 = vmatprep.subr.mxu0 0.0
        %v544 = vand.u32 %v254, 4294901760
        %v545 = vsub.f32 %v254, %v544
        %546 = vmatpush1.msra.mxu0 %v545
        %547 = vmatprep.subr.mxu0 0.0
        %v548 = vand.u32 %v255, 4294901760
        %v549 = vsub.f32 %v255, %v548
        %550 = vmatpush1.msra.mxu0 %v549
        %551 = vmatprep.subr.mxu0 0.0
        %v552 = vand.u32 %v256, 4294901760
        %v553 = vsub.f32 %v256, %v552
        %554 = vmatpush1.msra.mxu0 %v553
        %555 = vmatprep.subr.mxu0 0.0
        %v556 = vand.u32 %v257, 4294901760
        %v557 = vsub.f32 %v257, %v556
        %558 = vmatpush1.msra.mxu0 %v557
        %559 = vmatprep.subr.mxu0 0.0
        %v560 = vand.u32 %v258, 4294901760
        %v561 = vsub.f32 %v258, %v560
        %562 = vmatpush1.msra.mxu0 %v561
        %563 = vmatprep.subr.mxu0 0.0
        %v564 = vand.u32 %v259, 4294901760
        %v565 = vsub.f32 %v259, %v564
        %566 = vmatpush1.msra.mxu0 %v565
        %567 = vmatprep.subr.mxu0 0.0
        %v568 = vand.u32 %v260, 4294901760
        %v569 = vsub.f32 %v260, %v568
        %570 = vmatpush1.msra.mxu0 %v569
        %571 = vmatprep.subr.mxu0 0.0
        %v572 = vand.u32 %v261, 4294901760
        %v573 = vsub.f32 %v261, %v572
        %574 = vmatpush1.msra.mxu0 %v573
        %575 = vmatprep.subr.mxu0 0.0
        %v576 = vand.u32 %v262, 4294901760
        %v577 = vsub.f32 %v262, %v576
        %578 = vmatpush1.msra.mxu0 %v577
        %579 = vmatprep.subr.mxu0 0.0
        %v580 = vand.u32 %v263, 4294901760
        %v581 = vsub.f32 %v263, %v580
        %582 = vmatpush1.msra.mxu0 %v581
        %583 = vmatprep.subr.mxu0 0.0
        %v584 = vand.u32 %v264, 4294901760
        %v585 = vsub.f32 %v264, %v584
        %586 = vmatpush1.msra.mxu0 %v585
        %587 = vmatprep.subr.mxu0 0.0
        %v588 = vand.u32 %v265, 4294901760
        %v589 = vsub.f32 %v265, %v588
        %590 = vmatpush1.msra.mxu0 %v589
        %591 = vmatprep.subr.mxu0 0.0
        %592 = vmatpush1.msra.mxu0 0.0
        %593 = vmatprep.subr.mxu0 0.0
        %594 = vmatpush1.msra.mxu0 0.0
        %595 = vmatprep.subr.mxu0 0.0
        %596 = vmatpush1.msra.mxu0 0.0
        %597 = vmatprep.subr.mxu0 0.0
        %598 = vmatpush1.msra.mxu0 0.0
        %599 = vmatprep.subr.mxu0 0.0
        %600 = vmatpush1.msra.mxu0 0.0
        %601 = vmatprep.subr.mxu0 0.0
        %602 = vmatpush1.msra.mxu0 0.0
        %603 = vmatprep.subr.mxu0 0.0
        %604 = vmatpush1.msra.mxu0 0.0
        %605 = vmatprep.subr.mxu0 0.0
        %606 = vmatpush1.msra.mxu0 0.0
        %607 = vmatprep.subr.mxu0 0.0
        %608 = vmatpush1.msra.mxu0 0.0
        %609 = vmatprep.subr.mxu0 0.0
        %610 = vmatpush1.msra.mxu0 0.0
        %611 = vmatprep.subr.mxu0 0.0
        %612 = vmatpush1.msra.mxu0 0.0
        %613 = vmatprep.subr.mxu0 0.0
        %614 = vmatpush1.msra.mxu0 0.0
        %615 = vmatprep.subr.mxu0 0.0
        %616 = vmatpush1.msra.mxu0 0.0
        %617 = vmatprep.subr.mxu0 0.0
        %618 = vmatpush1.msra.mxu0 0.0
        %619 = vmatprep.subr.mxu0 0.0
        %620 = vmatpush1.msra.mxu0 0.0
        %621 = vmatprep.subr.mxu0 0.0
        %622 = vmatpush1.msra.mxu0 0.0
        %623 = vmatprep.mubr.f32.mxu0 0.0
        %v624 = vand.u32 %v266, 4294901760
        %v625 = vsub.f32 %v266, %v624
        %626 = vmatmul.mubr.f32.gmra.mrb[0].mxu0 %v625
        %v627 = vpop.f32.mrb[0].mxu0
        %v628 = vadd.f32 %v518, %v627
        %v629 = vpop.f32.mrb[0].mxu0
        %630 = vmatprep.mubr.f32.mxu0 0.0
        %v631 = vand.u32 %v267, 4294901760
        %v632 = vsub.f32 %v267, %v631
        %633 = vmatmul.mubr.f32.gmra.mrb[0].mxu0 %v632
        %v634 = vpop.f32.mrb[0].mxu0
        %v635 = vadd.f32 %v524, %v634
        %v636 = vpop.f32.mrb[0].mxu0
        %637 = vdwg.mxu0
        %638 = vmatprep.subr.mxu0 0.0
        %v639 = vand.u32 %v250, 4294901760
        %640 = vmatpush1.msra.mxu0 %v639
        %641 = vmatprep.subr.mxu0 0.0
        %v642 = vand.u32 %v251, 4294901760
        %643 = vmatpush1.msra.mxu0 %v642
        %644 = vmatprep.subr.mxu0 0.0
        %v645 = vand.u32 %v252, 4294901760
        %646 = vmatpush1.msra.mxu0 %v645
        %647 = vmatprep.subr.mxu0 0.0
        %v648 = vand.u32 %v253, 4294901760
        %649 = vmatpush1.msra.mxu0 %v648
        %650 = vmatprep.subr.mxu0 0.0
        %v651 = vand.u32 %v254, 4294901760
        %652 = vmatpush1.msra.mxu0 %v651
        %653 = vmatprep.subr.mxu0 0.0
        %v654 = vand.u32 %v255, 4294901760
        %655 = vmatpush1.msra.mxu0 %v654
        %656 = vmatprep.subr.mxu0 0.0
        %v657 = vand.u32 %v256, 4294901760
        %658 = vmatpush1.msra.mxu0 %v657
        %659 = vmatprep.subr.mxu0 0.0
        %v660 = vand.u32 %v257, 4294901760
        %661 = vmatpush1.msra.mxu0 %v660
        %662 = vmatprep.subr.mxu0 0.0
        %v663 = vand.u32 %v258, 4294901760
        %664 = vmatpush1.msra.mxu0 %v663
        %665 = vmatprep.subr.mxu0 0.0
        %v666 = vand.u32 %v259, 4294901760
        %667 = vmatpush1.msra.mxu0 %v666
        %668 = vmatprep.subr.mxu0 0.0
        %v669 = vand.u32 %v260, 4294901760
        %670 = vmatpush1.msra.mxu0 %v669
        %671 = vmatprep.subr.mxu0 0.0
        %v672 = vand.u32 %v261, 4294901760
        %673 = vmatpush1.msra.mxu0 %v672
        %674 = vmatprep.subr.mxu0 0.0
        %v675 = vand.u32 %v262, 4294901760
        %676 = vmatpush1.msra.mxu0 %v675
        %677 = vmatprep.subr.mxu0 0.0
        %v678 = vand.u32 %v263, 4294901760
        %679 = vmatpush1.msra.mxu0 %v678
        %680 = vmatprep.subr.mxu0 0.0
        %v681 = vand.u32 %v264, 4294901760
        %682 = vmatpush1.msra.mxu0 %v681
        %683 = vmatprep.subr.mxu0 0.0
        %v684 = vand.u32 %v265, 4294901760
        %685 = vmatpush1.msra.mxu0 %v684
        %686 = vmatprep.subr.mxu0 0.0
        %687 = vmatpush1.msra.mxu0 0.0
        %688 = vmatprep.subr.mxu0 0.0
        %689 = vmatpush1.msra.mxu0 0.0
        %690 = vmatprep.subr.mxu0 0.0
        %691 = vmatpush1.msra.mxu0 0.0
        %692 = vmatprep.subr.mxu0 0.0
        %693 = vmatpush1.msra.mxu0 0.0
        %694 = vmatprep.subr.mxu0 0.0
        %695 = vmatpush1.msra.mxu0 0.0
        %696 = vmatprep.subr.mxu0 0.0
        %697 = vmatpush1.msra.mxu0 0.0
        %698 = vmatprep.subr.mxu0 0.0
        %699 = vmatpush1.msra.mxu0 0.0
        %700 = vmatprep.subr.mxu0 0.0
        %701 = vmatpush1.msra.mxu0 0.0
        %702 = vmatprep.subr.mxu0 0.0
        %703 = vmatpush1.msra.mxu0 0.0
        %704 = vmatprep.subr.mxu0 0.0
        %705 = vmatpush1.msra.mxu0 0.0
        %706 = vmatprep.subr.mxu0 0.0
        %707 = vmatpush1.msra.mxu0 0.0
        %708 = vmatprep.subr.mxu0 0.0
        %709 = vmatpush1.msra.mxu0 0.0
        %710 = vmatprep.subr.mxu0 0.0
        %711 = vmatpush1.msra.mxu0 0.0
        %712 = vmatprep.subr.mxu0 0.0
        %713 = vmatpush1.msra.mxu0 0.0
        %714 = vmatprep.subr.mxu0 0.0
        %715 = vmatpush1.msra.mxu0 0.0
        %716 = vmatprep.subr.mxu0 0.0
        %717 = vmatpush1.msra.mxu0 0.0
        %718 = vmatprep.mubr.f32.mxu0 0.0
        %v719 = vand.u32 %v266, 4294901760
        %v720 = vsub.f32 %v266, %v719
        %v721 = vand.u32 %v720, 4294901760
        %722 = vmatmul.mubr.f32.gmra.mrb[0].mxu0 %v721
        %v723 = vpop.f32.mrb[0].mxu0
        %v724 = vadd.f32 %v628, %v723
        %v725 = vpop.f32.mrb[0].mxu0
        %726 = vmatprep.mubr.f32.mxu0 0.0
        %v727 = vand.u32 %v267, 4294901760
        %v728 = vsub.f32 %v267, %v727
        %v729 = vand.u32 %v728, 4294901760
        %730 = vmatmul.mubr.f32.gmra.mrb[0].mxu0 %v729
        %v731 = vpop.f32.mrb[0].mxu0
        %v732 = vadd.f32 %v635, %v731
        %v733 = vpop.f32.mrb[0].mxu0
        %734 = vdwg.mxu0
        %735 = vmatprep.subr.mxu0 0.0
        %v736 = vand.u32 %v250, 4294901760
        %v737 = vsub.f32 %v250, %v736
        %v738 = vand.u32 %v737, 4294901760
        %739 = vmatpush1.msra.mxu0 %v738
        %740 = vmatprep.subr.mxu0 0.0
        %v741 = vand.u32 %v251, 4294901760
        %v742 = vsub.f32 %v251, %v741
        %v743 = vand.u32 %v742, 4294901760
        %744 = vmatpush1.msra.mxu0 %v743
        %745 = vmatprep.subr.mxu0 0.0
        %v746 = vand.u32 %v252, 4294901760
        %v747 = vsub.f32 %v252, %v746
        %v748 = vand.u32 %v747, 4294901760
        %749 = vmatpush1.msra.mxu0 %v748
        %750 = vmatprep.subr.mxu0 0.0
        %v751 = vand.u32 %v253, 4294901760
        %v752 = vsub.f32 %v253, %v751
        %v753 = vand.u32 %v752, 4294901760
        %754 = vmatpush1.msra.mxu0 %v753
        %755 = vmatprep.subr.mxu0 0.0
        %v756 = vand.u32 %v254, 4294901760
        %v757 = vsub.f32 %v254, %v756
        %v758 = vand.u32 %v757, 4294901760
        %759 = vmatpush1.msra.mxu0 %v758
        %760 = vmatprep.subr.mxu0 0.0
        %v761 = vand.u32 %v255, 4294901760
        %v762 = vsub.f32 %v255, %v761
        %v763 = vand.u32 %v762, 4294901760
        %764 = vmatpush1.msra.mxu0 %v763
        %765 = vmatprep.subr.mxu0 0.0
        %v766 = vand.u32 %v256, 4294901760
        %v767 = vsub.f32 %v256, %v766
        %v768 = vand.u32 %v767, 4294901760
        %769 = vmatpush1.msra.mxu0 %v768
        %770 = vmatprep.subr.mxu0 0.0
        %v771 = vand.u32 %v257, 4294901760
        %v772 = vsub.f32 %v257, %v771
        %v773 = vand.u32 %v772, 4294901760
        %774 = vmatpush1.msra.mxu0 %v773
        %775 = vmatprep.subr.mxu0 0.0
        %v776 = vand.u32 %v258, 4294901760
        %v777 = vsub.f32 %v258, %v776
        %v778 = vand.u32 %v777, 4294901760
        %779 = vmatpush1.msra.mxu0 %v778
        %780 = vmatprep.subr.mxu0 0.0
        %v781 = vand.u32 %v259, 4294901760
        %v782 = vsub.f32 %v259, %v781
        %v783 = vand.u32 %v782, 4294901760
        %784 = vmatpush1.msra.mxu0 %v783
        %785 = vmatprep.subr.mxu0 0.0
        %v786 = vand.u32 %v260, 4294901760
        %v787 = vsub.f32 %v260, %v786
        %v788 = vand.u32 %v787, 4294901760
        %789 = vmatpush1.msra.mxu0 %v788
        %790 = vmatprep.subr.mxu0 0.0
        %v791 = vand.u32 %v261, 4294901760
        %v792 = vsub.f32 %v261, %v791
        %v793 = vand.u32 %v792, 4294901760
        %794 = vmatpush1.msra.mxu0 %v793
        %795 = vmatprep.subr.mxu0 0.0
        %v796 = vand.u32 %v262, 4294901760
        %v797 = vsub.f32 %v262, %v796
        %v798 = vand.u32 %v797, 4294901760
        %799 = vmatpush1.msra.mxu0 %v798
        %800 = vmatprep.subr.mxu0 0.0
        %v801 = vand.u32 %v263, 4294901760
        %v802 = vsub.f32 %v263, %v801
        %v803 = vand.u32 %v802, 4294901760
        %804 = vmatpush1.msra.mxu0 %v803
        %805 = vmatprep.subr.mxu0 0.0
        %v806 = vand.u32 %v264, 4294901760
        %v807 = vsub.f32 %v264, %v806
        %v808 = vand.u32 %v807, 4294901760
        %809 = vmatpush1.msra.mxu0 %v808
        %810 = vmatprep.subr.mxu0 0.0
        %v811 = vand.u32 %v265, 4294901760
        %v812 = vsub.f32 %v265, %v811
        %v813 = vand.u32 %v812, 4294901760
        %814 = vmatpush1.msra.mxu0 %v813
        %815 = vmatprep.subr.mxu0 0.0
        %816 = vmatpush1.msra.mxu0 0.0
        %817 = vmatprep.subr.mxu0 0.0
        %818 = vmatpush1.msra.mxu0 0.0
        %819 = vmatprep.subr.mxu0 0.0
        %820 = vmatpush1.msra.mxu0 0.0
        %821 = vmatprep.subr.mxu0 0.0
        %822 = vmatpush1.msra.mxu0 0.0
        %823 = vmatprep.subr.mxu0 0.0
        %824 = vmatpush1.msra.mxu0 0.0
        %825 = vmatprep.subr.mxu0 0.0
        %826 = vmatpush1.msra.mxu0 0.0
        %827 = vmatprep.subr.mxu0 0.0
        %828 = vmatpush1.msra.mxu0 0.0
        %829 = vmatprep.subr.mxu0 0.0
        %830 = vmatpush1.msra.mxu0 0.0
        %831 = vmatprep.subr.mxu0 0.0
        %832 = vmatpush1.msra.mxu0 0.0
        %833 = vmatprep.subr.mxu0 0.0
        %834 = vmatpush1.msra.mxu0 0.0
        %835 = vmatprep.subr.mxu0 0.0
        %836 = vmatpush1.msra.mxu0 0.0
        %837 = vmatprep.subr.mxu0 0.0
        %838 = vmatpush1.msra.mxu0 0.0
        %839 = vmatprep.subr.mxu0 0.0
        %840 = vmatpush1.msra.mxu0 0.0
        %841 = vmatprep.subr.mxu0 0.0
        %842 = vmatpush1.msra.mxu0 0.0
        %843 = vmatprep.subr.mxu0 0.0
        %844 = vmatpush1.msra.mxu0 0.0
        %845 = vmatprep.subr.mxu0 0.0
        %846 = vmatpush1.msra.mxu0 0.0
        %847 = vmatprep.mubr.f32.mxu0 0.0
        %v848 = vand.u32 %v266, 4294901760
        %849 = vmatmul.mubr.f32.gmra.mrb[0].mxu0 %v848
        %v850 = vpop.f32.mrb[0].mxu0
        %v851 = vadd.f32 %v724, %v850
        %v852 = vpop.f32.mrb[0].mxu0
        %853 = vmatprep.mubr.f32.mxu0 0.0
        %v854 = vand.u32 %v267, 4294901760
        %855 = vmatmul.mubr.f32.gmra.mrb[0].mxu0 %v854
        %v856 = vpop.f32.mrb[0].mxu0
        %v857 = vadd.f32 %v732, %v856
        %v858 = vpop.f32.mrb[0].mxu0
        %859 = vdwg.mxu0
        %860 = vmatprep.subr.mxu0 0.0
        %v861 = vand.u32 %v250, 4294901760
        %862 = vmatpush1.msra.mxu0 %v861
        %863 = vmatprep.subr.mxu0 0.0
        %v864 = vand.u32 %v251, 4294901760
        %865 = vmatpush1.msra.mxu0 %v864
        %866 = vmatprep.subr.mxu0 0.0
        %v867 = vand.u32 %v252, 4294901760
        %868 = vmatpush1.msra.mxu0 %v867
        %869 = vmatprep.subr.mxu0 0.0
        %v870 = vand.u32 %v253, 4294901760
        %871 = vmatpush1.msra.mxu0 %v870
        %872 = vmatprep.subr.mxu0 0.0
        %v873 = vand.u32 %v254, 4294901760
        %874 = vmatpush1.msra.mxu0 %v873
        %875 = vmatprep.subr.mxu0 0.0
        %v876 = vand.u32 %v255, 4294901760
        %877 = vmatpush1.msra.mxu0 %v876
        %878 = vmatprep.subr.mxu0 0.0
        %v879 = vand.u32 %v256, 4294901760
        %880 = vmatpush1.msra.mxu0 %v879
        %881 = vmatprep.subr.mxu0 0.0
        %v882 = vand.u32 %v257, 4294901760
        %883 = vmatpush1.msra.mxu0 %v882
        %884 = vmatprep.subr.mxu0 0.0
        %v885 = vand.u32 %v258, 4294901760
        %886 = vmatpush1.msra.mxu0 %v885
        %887 = vmatprep.subr.mxu0 0.0
        %v888 = vand.u32 %v259, 4294901760
        %889 = vmatpush1.msra.mxu0 %v888
        %890 = vmatprep.subr.mxu0 0.0
        %v891 = vand.u32 %v260, 4294901760
        %892 = vmatpush1.msra.mxu0 %v891
        %893 = vmatprep.subr.mxu0 0.0
        %v894 = vand.u32 %v261, 4294901760
        %895 = vmatpush1.msra.mxu0 %v894
        %896 = vmatprep.subr.mxu0 0.0
        %v897 = vand.u32 %v262, 4294901760
        %898 = vmatpush1.msra.mxu0 %v897
        %899 = vmatprep.subr.mxu0 0.0
        %v900 = vand.u32 %v263, 4294901760
        %901 = vmatpush1.msra.mxu0 %v900
        %902 = vmatprep.subr.mxu0 0.0
        %v903 = vand.u32 %v264, 4294901760
        %904 = vmatpush1.msra.mxu0 %v903
        %905 = vmatprep.subr.mxu0 0.0
        %v906 = vand.u32 %v265, 4294901760
        %907 = vmatpush1.msra.mxu0 %v906
        %908 = vmatprep.subr.mxu0 0.0
        %909 = vmatpush1.msra.mxu0 0.0
        %910 = vmatprep.subr.mxu0 0.0
        %911 = vmatpush1.msra.mxu0 0.0
        %912 = vmatprep.subr.mxu0 0.0
        %913 = vmatpush1.msra.mxu0 0.0
        %914 = vmatprep.subr.mxu0 0.0
        %915 = vmatpush1.msra.mxu0 0.0
        %916 = vmatprep.subr.mxu0 0.0
        %917 = vmatpush1.msra.mxu0 0.0
        %918 = vmatprep.subr.mxu0 0.0
        %919 = vmatpush1.msra.mxu0 0.0
        %920 = vmatprep.subr.mxu0 0.0
        %921 = vmatpush1.msra.mxu0 0.0
        %922 = vmatprep.subr.mxu0 0.0
        %923 = vmatpush1.msra.mxu0 0.0
        %924 = vmatprep.subr.mxu0 0.0
        %925 = vmatpush1.msra.mxu0 0.0
        %926 = vmatprep.subr.mxu0 0.0
        %927 = vmatpush1.msra.mxu0 0.0
        %928 = vmatprep.subr.mxu0 0.0
        %929 = vmatpush1.msra.mxu0 0.0
        %930 = vmatprep.subr.mxu0 0.0
        %931 = vmatpush1.msra.mxu0 0.0
        %932 = vmatprep.subr.mxu0 0.0
        %933 = vmatpush1.msra.mxu0 0.0
        %934 = vmatprep.subr.mxu0 0.0
        %935 = vmatpush1.msra.mxu0 0.0
        %936 = vmatprep.subr.mxu0 0.0
        %937 = vmatpush1.msra.mxu0 0.0
        %938 = vmatprep.subr.mxu0 0.0
        %939 = vmatpush1.msra.mxu0 0.0
        %940 = vmatprep.mubr.f32.mxu0 0.0
        %v941 = vand.u32 %v266, 4294901760
        %942 = vmatmul.mubr.f32.gmra.mrb[0].mxu0 %v941
        %v943 = vpop.f32.mrb[0].mxu0
        %v944 = vadd.f32 %v851, %v943
        %v945 = vpop.f32.mrb[0].mxu0
        %946 = vmatprep.mubr.f32.mxu0 0.0
        %v947 = vand.u32 %v267, 4294901760
        %948 = vmatmul.mubr.f32.gmra.mrb[0].mxu0 %v947
        %v949 = vpop.f32.mrb[0].mxu0
        %v950 = vadd.f32 %v857, %v949
        %v951 = vpop.f32.mrb[0].mxu0
        %952 = vdwg.mxu0
        %vm953 = vcmask 523264
        %954 = vst.msk [vmem:[%s173] sm:$0xff] %vm953, %v944
        %955 = vst.msk [vmem:[%s173 + $0x8] sm:$0xff] %vm953, %v950
        %s956 = sand.u32 %s75, 1
        %s957 = scalar_lea.sflag [#allocation4], %s956
        %s958 = sand.u32 %s75, 1
        %s959 = smul.addr %s958, 16
        %s960 = scalar_lea.vmem [#allocation7], %s959
        // Predicated region
        $region37: #{tpu_custom_call.1} parent=27 // pred_check
          %p961 = pneg %p85
        $region38: #{tpu_custom_call.1} parent=27 // pred_check_branch
          %963 = sbr.rel (%p961) target = $region40
        $region39: #{tpu_custom_call.1} parent=27 // pred_region
          %s964 = smul.u32 2, %s20
          %s966 = ssub.s32 256, 256
          %967 = vsyncadd %s957, %s966
          %s968 = smul.addr %s964, 128
          %s969 = scalar_lea.hbm %s2, %s968
          %s970 = sshll.u32 %s960, 4
          %s971 = int_to_ptr.vmem [resolvable:$true] %s970
          %976 = dma.vmem_to_hbm [thread:$0]  %s971, 256, %s969, %s957, 128, 128, 8
        $region40: #{tpu_custom_call.1} parent=27 // pred_fallthru
          _
      $region28: #{tpu_custom_call.1} parent=5 // pred_fallthru
        _
      %p977 = scmp.le.s32.totalorder 2, %s15
      // Predicated region
      $region41: #{tpu_custom_call.1} parent=5 // pred_check
        %p978 = pneg %p977
      $region42: #{tpu_custom_call.1} parent=5 // pred_check_branch
        %980 = sbr.rel (%p978) target = $region44
      $region43: #{tpu_custom_call.1} parent=5 // pred_region
        %s981 = ssub.s32 %s15, 2
        // Predicated region
        $region45: #{tpu_custom_call.1} parent=43 // pred_check
          %p982 = pneg %p91
        $region46: #{tpu_custom_call.1} parent=43 // pred_check_branch
          %984 = sbr.rel (%p982) target = $region48
        $region47: #{tpu_custom_call.1} parent=43 // pred_region
          %s985 = sand.u32 %s76, 1
          %s986 = scalar_lea.sflag [#allocation4], %s985
          %s987 = sand.u32 %s76, 1
          %s988 = smul.addr %s987, 16
          %s989 = scalar_lea.vmem [#allocation7], %s988
          %990 = dma.done %s986, 256
        $region48: #{tpu_custom_call.1} parent=43 // pred_fallthru
          _
      $region44: #{tpu_custom_call.1} parent=5 // pred_fallthru
        _
    $region6: #{tpu_custom_call.1} parent=1 // loop_footer
      %s19 = sadd.s32 1, %s15
    $region7: #{tpu_custom_call.1} parent=1 // loop_footer_branch
      %14 = sbr.rel target = $region3
    $region8: #{tpu_custom_call.1} parent=1 // loop_exit
      _
    %991 = vsyncpa [#allocation3], 1
    %s992 = scalar_lea.sflag [#allocation3], 1
    %993 = vsyncpa %s992, 1
    %994 = vsyncpa [#allocation4], 1
    %s995 = scalar_lea.sflag [#allocation4], 1
    %996 = vsyncpa %s995, 1
    %997 = vsyncpa [#allocation5], 1
    %s998 = scalar_lea.sflag [#allocation5], 1
    %999 = vsyncpa %s998, 1

</llo_original>
